<compile_context>
chip_gen: v5e
topology: v5e:2x2
jax: 0.10.0
libtpu: 0.0.40
codegen_flags: <defaults>
</compile_context>

<pallas_src>
import functools

import jax
import jax.numpy as jnp
from jax.experimental import pallas as pl
from jax.experimental.pallas import tpu as pltpu


C_PAD = 128  # lane-dense padded channel width (in/hidden/out all padded to this)


def _sage_fused_kernel(adj_ref, x0_ref, w_ref, wr_ref, b_ref, o_ref, x_scr,
                       *, num_layers):
    li = pl.program_id(0)

    # Layer 0: bring the (padded) input features into the resident VMEM scratch.
    @pl.when(li == 0)
    def _():
        x_scr[...] = x0_ref[...]

    x_f32 = x_scr[...]                       # (N_pad, C_PAD) f32, resident across layers
    x_bf = x_f32.astype(jnp.bfloat16)
    adj_bf = adj_ref[...]                    # (N_pad, N_pad) bf16, row-normalized (mean agg)

    # Mean aggregation then projection: bf16 inputs, f32 accumulation on the MXU.
    agg = jnp.dot(adj_bf, x_bf, preferred_element_type=jnp.float32)
    out = jnp.dot(agg.astype(jnp.bfloat16), w_ref[...],
                  preferred_element_type=jnp.float32)
    out = out + jnp.dot(x_bf, wr_ref[...], preferred_element_type=jnp.float32)
    out = out + b_ref[...]                   # f32 bias, broadcast over nodes

    # All but the last layer: ReLU (dropout is eval-mode identity); keep x resident.
    @pl.when(li < num_layers - 1)
    def _():
        x_scr[...] = jnp.maximum(out, 0.0)

    # Last layer: single lane-dense store of the output block.
    @pl.when(li == num_layers - 1)
    def _():
        o_ref[...] = out


def _pad2d(a, rows, cols, dtype=None):
    r, c = a.shape
    out = jnp.pad(a, ((0, rows - r), (0, cols - c)))
    return out.astype(dtype) if dtype is not None else out


def sage_forward(params, x, adj):
    """SAGE.forward with a dense 0/1 adjacency, fused into one Pallas kernel."""
    num_layers = len(params)
    n, _ = x.shape
    c_out = params[-1]["bias"].shape[0]

    n_pad = ((n + 7) // 8) * 8               # sublane multiple

    # torch_sparse matmul(reduce='mean') == row-normalized adjacency.
    deg = jnp.maximum(adj.sum(axis=1, keepdims=True), 1.0)
    adj_norm = _pad2d(adj / deg, n_pad, n_pad, jnp.bfloat16)

    x_pad = _pad2d(x, n_pad, C_PAD, jnp.float32)
    w_all = jnp.stack([_pad2d(p["weight"], C_PAD, C_PAD, jnp.bfloat16) for p in params])
    wr_all = jnp.stack([_pad2d(p["root_weight"], C_PAD, C_PAD, jnp.bfloat16) for p in params])
    b_all = jnp.stack([_pad2d(p["bias"][None, :], 1, C_PAD, jnp.float32) for p in params])

    flops_per_layer = 2 * n_pad * n_pad * C_PAD + 2 * 2 * n_pad * C_PAD * C_PAD
    cost = pl.CostEstimate(
        flops=num_layers * flops_per_layer,
        transcendentals=0,
        bytes_accessed=(adj_norm.size * 2 + x_pad.size * 4 + w_all.size * 2
                        + wr_all.size * 2 + b_all.size * 4 + n_pad * C_PAD * 4),
    )

    out_pad = pl.pallas_call(
        functools.partial(_sage_fused_kernel, num_layers=num_layers),
        out_shape=jax.ShapeDtypeStruct((n_pad, C_PAD), jnp.float32),
        grid=(num_layers,),
        in_specs=[
            pl.BlockSpec((n_pad, n_pad), lambda l: (0, 0)),          # adj (bf16), DMA'd once
            pl.BlockSpec((n_pad, C_PAD), lambda l: (0, 0)),          # x0 (f32), DMA'd once
            pl.BlockSpec((None, C_PAD, C_PAD), lambda l: (l, 0, 0)),  # W[l]      (bf16)
            pl.BlockSpec((None, C_PAD, C_PAD), lambda l: (l, 0, 0)),  # W_root[l] (bf16)
            pl.BlockSpec((None, 1, C_PAD), lambda l: (l, 0, 0)),      # b[l]      (f32)
        ],
        out_specs=pl.BlockSpec((n_pad, C_PAD), lambda l: (0, 0)),
        scratch_shapes=[pltpu.VMEM((n_pad, C_PAD), jnp.float32)],     # resident activation
        compiler_params=pltpu.CompilerParams(
            dimension_semantics=("arbitrary",),   # layers are sequentially dependent
        ),
        cost_estimate=cost,
    )(adj_norm, x_pad, w_all, wr_all, b_all)

    return out_pad[:n, :c_out]


def glorot(key, shape):
    fan_in, fan_out = shape
    limit = jnp.sqrt(6.0 / (fan_in + fan_out))
    return jax.random.uniform(key, shape, jnp.float32, -limit, limit)


def init_sage_params(key, in_channels, hidden_channels, out_channels, num_layers):
    """Glorot weight / root_weight, zero bias — mirrors SAGEConv.reset_parameters."""
    dims = [in_channels] + [hidden_channels] * (num_layers - 1) + [out_channels]
    params = []
    for li in range(num_layers):
        key, k_w, k_rw = jax.random.split(key, 3)
        c_in, c_o = dims[li], dims[li + 1]
        params.append({
            "weight": glorot(k_w, (c_in, c_o)),
            "root_weight": glorot(k_rw, (c_in, c_o)),
            "bias": jnp.zeros((c_o,), jnp.float32),
        })
    return params


if __name__ == "__main__":
    # Small synthetic problem: 16 nodes, in=8, hidden=32, out=8, 3 layers.
    N, IN_C, HID_C, OUT_C, LAYERS = 16, 8, 32, 8, 3

    key = jax.random.PRNGKey(0)
    k_params, k_x, k_adj = jax.random.split(key, 3)

    params = init_sage_params(k_params, IN_C, HID_C, OUT_C, LAYERS)
    x = jax.random.normal(k_x, (N, IN_C), jnp.float32)

    # Dense 0/1 adjacency; degree is clamped to >= 1 inside the wrapper.
    adj = (jax.random.uniform(k_adj, (N, N)) < 0.3).astype(jnp.float32)

    out = sage_forward(params, x, adj)
    jax.block_until_ready(out)
    assert out.shape == (N, OUT_C)

    # Reference 1: mirrors the kernel's bf16 matmul inputs / f32 accumulation (tight check).
    deg = jnp.maximum(adj.sum(axis=1, keepdims=True), 1.0)
    adj_norm_bf = (adj / deg).astype(jnp.bfloat16)

    def ref_bf16(params, h):
        for li, p in enumerate(params):
            agg = jnp.dot(adj_norm_bf, h.astype(jnp.bfloat16),
                          preferred_element_type=jnp.float32)
            o = jnp.dot(agg.astype(jnp.bfloat16), p["weight"].astype(jnp.bfloat16),
                        preferred_element_type=jnp.float32)
            o = o + jnp.dot(h.astype(jnp.bfloat16), p["root_weight"].astype(jnp.bfloat16),
                            preferred_element_type=jnp.float32)
            o = o + p["bias"]
            h = jnp.maximum(o, 0.0) if li < len(params) - 1 else o
        return h

    # Reference 2: pure f32 semantics of the PyTorch module (loose check vs bf16 MXU path).
    def ref_f32(params, h):
        adj_n = adj / deg
        for li, p in enumerate(params):
            o = (adj_n @ h) @ p["weight"] + h @ p["root_weight"] + p["bias"]
            h = jnp.maximum(o, 0.0) if li < len(params) - 1 else o
        return h

    assert jnp.allclose(out, ref_bf16(params, x), atol=2e-3, rtol=2e-3)
    assert jnp.allclose(out, ref_f32(params, x), atol=5e-2, rtol=5e-2)

    print("KERNEL_OK")
</pallas_src>

<mosaic_0001>
module attributes {stable_mosaic.version = 11 : i64} {
  func.func @_sage_fused_kernel(%arg0: i32, %arg1: memref<16x16xbf16, #tpu.memory_space<vmem>>, %arg2: memref<16x128xf32, #tpu.memory_space<vmem>>, %arg3: memref<1x128x128xbf16, #tpu.memory_space<vmem>>, %arg4: memref<1x128x128xbf16, #tpu.memory_space<vmem>>, %arg5: memref<1x1x128xf32, #tpu.memory_space<vmem>>, %arg6: memref<16x128xf32, #tpu.memory_space<vmem>>, %arg7: memref<16x128xf32, #tpu.memory_space<vmem>>) attributes {dimension_semantics = [#tpu.dimension_semantics<arbitrary>], iteration_bounds = array<i64: 3>, scalar_prefetch = 0 : i64, scratch_operands = 1 : i64, tpu.core_type = #tpu.core_type<tc>, window_params = [{pipeline_mode = #tpu.pipeline_mode<synchronous>, transform_indices = @transform_0, window_bounds = array<i64: 16, 16>}, {pipeline_mode = #tpu.pipeline_mode<synchronous>, transform_indices = @transform_1, window_bounds = array<i64: 16, 128>}, {transform_indices = @transform_2, window_bounds = array<i64: 1, 128, 128>}, {transform_indices = @transform_3, window_bounds = array<i64: 1, 128, 128>}, {transform_indices = @transform_4, window_bounds = array<i64: 1, 1, 128>}, {pipeline_mode = #tpu.pipeline_mode<synchronous>, transform_indices = @transform_5, window_bounds = array<i64: 16, 128>}]} {
    %c0_i32 = arith.constant 0 : i32
    %0 = arith.cmpi eq, %arg0, %c0_i32 : i32
    %1 = arith.extui %0 : i1 to i32
    %c0_i32_0 = arith.constant 0 : i32
    %2 = arith.cmpi ne, %1, %c0_i32_0 : i32
    scf.if %2 {
      %c0_18 = arith.constant 0 : index
      %c0_19 = arith.constant 0 : index
      %25 = vector.load %arg2[%c0_18, %c0_19] : memref<16x128xf32, #tpu.memory_space<vmem>>, vector<16x128xf32>
      %c0_20 = arith.constant 0 : index
      %c0_21 = arith.constant 0 : index
      %26 = vector.load %arg7[%c0_20, %c0_21] : memref<16x128xf32, #tpu.memory_space<vmem>>, vector<16x128xf32>
      tpu.vector_store %arg7[%c0_20, %c0_21], %25 {strides = array<i32>} : memref<16x128xf32, #tpu.memory_space<vmem>>, vector<16x128xf32>,
    } else {
    }
    %c0 = arith.constant 0 : index
    %c0_1 = arith.constant 0 : index
    %3 = vector.load %arg7[%c0, %c0_1] : memref<16x128xf32, #tpu.memory_space<vmem>>, vector<16x128xf32>
    %4 = arith.truncf %3 : vector<16x128xf32> to vector<16x128xbf16>
    %c0_2 = arith.constant 0 : index
    %c0_3 = arith.constant 0 : index
    %5 = vector.load %arg1[%c0_2, %c0_3] : memref<16x16xbf16, #tpu.memory_space<vmem>>, vector<16x16xbf16>
    %cst = arith.constant dense<0.000000e+00> : vector<16x128xf32>
    %6 = tpu.matmul %5, %4, %cst {dimension_numbers = #tpu.dot_dimension_numbers<[1], [0], [0], [1], [0, 0, 1, 1], [], []>} : vector<16x16xbf16>, vector<16x128xbf16>, vector<16x128xf32> -> vector<16x128xf32>
    %7 = arith.truncf %6 : vector<16x128xf32> to vector<16x128xbf16>
    %c0_4 = arith.constant 0 : index
    %c0_5 = arith.constant 0 : index
    %c0_6 = arith.constant 0 : index
    %8 = vector.load %arg3[%c0_4, %c0_5, %c0_6] : memref<1x128x128xbf16, #tpu.memory_space<vmem>>, vector<1x128x128xbf16>
    %9 = vector.shape_cast %8 : vector<1x128x128xbf16> to vector<128x128xbf16>
    %cst_7 = arith.constant dense<0.000000e+00> : vector<16x128xf32>
    %10 = tpu.matmul %7, %9, %cst_7 {dimension_numbers = #tpu.dot_dimension_numbers<[1], [0], [0], [1], [0, 0, 1, 1], [], []>} : vector<16x128xbf16>, vector<128x128xbf16>, vector<16x128xf32> -> vector<16x128xf32>
    %c0_8 = arith.constant 0 : index
    %c0_9 = arith.constant 0 : index
    %c0_10 = arith.constant 0 : index
    %11 = vector.load %arg4[%c0_8, %c0_9, %c0_10] : memref<1x128x128xbf16, #tpu.memory_space<vmem>>, vector<1x128x128xbf16>
    %12 = vector.shape_cast %11 : vector<1x128x128xbf16> to vector<128x128xbf16>
    %cst_11 = arith.constant dense<0.000000e+00> : vector<16x128xf32>
    %13 = tpu.matmul %4, %12, %cst_11 {dimension_numbers = #tpu.dot_dimension_numbers<[1], [0], [0], [1], [0, 0, 1, 1], [], []>} : vector<16x128xbf16>, vector<128x128xbf16>, vector<16x128xf32> -> vector<16x128xf32>
    %14 = arith.addf %10, %13 : vector<16x128xf32>
    %c0_12 = arith.constant 0 : index
    %c0_13 = arith.constant 0 : index
    %c0_14 = arith.constant 0 : index
    %15 = vector.load %arg5[%c0_12, %c0_13, %c0_14] : memref<1x1x128xf32, #tpu.memory_space<vmem>>, vector<1x1x128xf32>
    %16 = vector.shape_cast %15 : vector<1x1x128xf32> to vector<1x128xf32>
    %17 = vector.broadcast %16 : vector<1x128xf32> to vector<16x128xf32>
    %18 = arith.addf %14, %17 : vector<16x128xf32>
    %c2_i32 = arith.constant 2 : i32
    %19 = arith.cmpi slt, %arg0, %c2_i32 : i32
    %20 = arith.extui %19 : i1 to i32
    %c0_i32_15 = arith.constant 0 : i32
    %21 = arith.cmpi ne, %20, %c0_i32_15 : i32
    scf.if %21 {
      %cst_18 = arith.constant 0.000000e+00 : f32
      %25 = vector.broadcast %cst_18 : f32 to vector<16x128xf32>
      %26 = arith.maximumf %18, %25 : vector<16x128xf32>
      %c0_19 = arith.constant 0 : index
      %c0_20 = arith.constant 0 : index
      %27 = vector.load %arg7[%c0_19, %c0_20] : memref<16x128xf32, #tpu.memory_space<vmem>>, vector<16x128xf32>
      tpu.vector_store %arg7[%c0_19, %c0_20], %26 {strides = array<i32>} : memref<16x128xf32, #tpu.memory_space<vmem>>, vector<16x128xf32>,
    } else {
    }
    %c2_i32_16 = arith.constant 2 : i32
    %22 = arith.cmpi eq, %arg0, %c2_i32_16 : i32
    %23 = arith.extui %22 : i1 to i32
    %c0_i32_17 = arith.constant 0 : i32
    %24 = arith.cmpi ne, %23, %c0_i32_17 : i32
    scf.if %24 {
      %c0_18 = arith.constant 0 : index
      %c0_19 = arith.constant 0 : index
      %25 = vector.load %arg6[%c0_18, %c0_19] : memref<16x128xf32, #tpu.memory_space<vmem>>, vector<16x128xf32>
      tpu.vector_store %arg6[%c0_18, %c0_19], %18 {strides = array<i32>} : memref<16x128xf32, #tpu.memory_space<vmem>>, vector<16x128xf32>,
    } else {
    }
    return
  }
  func.func @transform_0(%arg0: i32) -> (i32, i32) {
    %c0_i32 = arith.constant 0 : i32
    %c0_i32_0 = arith.constant 0 : i32
    %c0_i32_1 = arith.constant 0 : i32
    return %c0_i32, %c0_i32_0 : i32, i32
  }
  func.func @transform_1(%arg0: i32) -> (i32, i32) {
    %c0_i32 = arith.constant 0 : i32
    %c0_i32_0 = arith.constant 0 : i32
    %c0_i32_1 = arith.constant 0 : i32
    return %c0_i32, %c0_i32_0 : i32, i32
  }
  func.func @transform_2(%arg0: i32) -> (i32, i32, i32) {
    %c0_i32 = arith.constant 0 : i32
    %c0_i32_0 = arith.constant 0 : i32
    %c0_i32_1 = arith.constant 0 : i32
    return %arg0, %c0_i32, %c0_i32_0 : i32, i32, i32
  }
  func.func @transform_3(%arg0: i32) -> (i32, i32, i32) {
    %c0_i32 = arith.constant 0 : i32
    %c0_i32_0 = arith.constant 0 : i32
    %c0_i32_1 = arith.constant 0 : i32
    return %arg0, %c0_i32, %c0_i32_0 : i32, i32, i32
  }
  func.func @transform_4(%arg0: i32) -> (i32, i32, i32) {
    %c0_i32 = arith.constant 0 : i32
    %c0_i32_0 = arith.constant 0 : i32
    %c0_i32_1 = arith.constant 0 : i32
    return %arg0, %c0_i32, %c0_i32_0 : i32, i32, i32
  }
  func.func @transform_5(%arg0: i32) -> (i32, i32) {
    %c0_i32 = arith.constant 0 : i32
    %c0_i32_0 = arith.constant 0 : i32
    %c0_i32_1 = arith.constant 0 : i32
    return %c0_i32, %c0_i32_0 : i32, i32
  }
}

</mosaic_0001>

<llo_original>
// kernel: tpu_custom_call.1
$region0: #{tpu_custom_call.1}
  #allocation0 [shape = 'u32[]', space=smem, size = 0x4, offset = 0x4, fixed_abs, tag = 'smem constant byte address 0x4 - core index']
  #allocation1 [shape = 'u32[72,128]{1,0:T(1,128)}', space=vmem, size = 0x9000, scoped, tag = 'internal scratch']
  #allocation2 [shape = 'f32[16,128]{1,0:T(8,128)}', space=vmem, size = 0x2000, scoped, tag = 'scratch operand']
  %s0 = inlined_call_operand.hbm [shape: bf16[16,16], index: 0, kind: input, shape index: {}]
  %s1 = inlined_call_operand.hbm [shape: f32[16,128], index: 1, kind: input, shape index: {}]
  %s2 = inlined_call_operand.hbm [shape: bf16[3,128,128], index: 2, kind: input, shape index: {}]
  %s3 = inlined_call_operand.hbm [shape: bf16[3,128,128], index: 3, kind: input, shape index: {}]
  %s4 = inlined_call_operand.vmem [shape: f32[3,1,128], index: 4, kind: input, shape index: {}]
  %s5 = inlined_call_operand.hbm [shape: f32[16,128], index: 5, kind: output, shape index: {}]
  %s6 = sld [smem:[#allocation0]]
  $region81: #{tpu_custom_call.1} parent=0
    _
  %s8 = ssub.s32 1, %s6
  %s9 = scalar_select 0, %s8, %s6
  $region1: #{tpu_custom_call.1} parent=0
    #allocation3 [shape = 'u8[4096]{0}', space=vmem, size = 0x1000, scoped, tag = 'input window, operand 0, single buffered']
    #allocation4 [shape = 's32[2]{0}', space=sflag, size = 0x8, scoped, tag = 'scoped memory for tpu_custom_call.1']
    #allocation5 [shape = 's32[2]{0}', space=sflag, size = 0x8, scoped, tag = 'scoped memory for tpu_custom_call.1']
    #allocation6 [shape = 'u8[8192]{0}', space=vmem, size = 0x2000, scoped, tag = 'input window, operand 1, single buffered']
    #allocation7 [shape = 's32[1]{0}', space=sflag, size = 0x4, scoped, tag = 'scoped memory for tpu_custom_call.1']
    #allocation8 [shape = 'u8[65536]{0}', space=vmem, size = 0x10000, scoped, tag = 'input window, operand 2']
    #allocation9 [shape = 'u8[65536]{0}', space=vmem, size = 0x10000, scoped, tag = 'input window, operand 3']
    #allocation10 [shape = 'u8[8192]{0}', space=vmem, size = 0x2000, scoped, tag = 'output window, operand 0, single buffered']
    %10 = vsyncpa [#allocation4], 0
    %11 = vsyncpa [#allocation7], 0
    %12 = vsyncpa [#allocation5], 0
    loop: start=0, step=1, limit=5
    $region2: #{tpu_custom_call.1} parent=1 // loop_pre_header
      _
    $region3: #{tpu_custom_call.1} parent=1 // loop_header
      %s14 = sphi 0, %s18
      %p15 = scmp.ge.s32.totalorder %s14, 5
      %s22 = sphi 0, %s22
      %s24 = sphi 0, %s22
      %s25 = sphi 0, %s24
      %s39 = sphi 0, %s25
      %s43 = sphi 0, %s43
      %s45 = sphi 0, %s43
      %s46 = sphi 0, %s45
      %s60 = sphi 0, %s46
      %s66 = sphi 0, %s68
      %s69 = sphi 0, %s66
      %s70 = sphi 0, %s69
      %s86 = sphi 0, %s70
      %s92 = sphi 0, %s94
      %s95 = sphi 0, %s92
      %s96 = sphi 0, %s95
      %s112 = sphi 0, %s96
      %s118 = sphi 0, %s120
      %s121 = sphi 0, %s118
      %s122 = sphi 0, %s121
      %s138 = sphi 0, %s122
      %s142 = sphi 0, %s142
      %s144 = sphi 0, %s142
      %s145 = sphi 0, %s144
      %s159 = sphi 0, %s145
    $region4: #{tpu_custom_call.1} parent=1 // loop_header_branch
      %17 = sbr.rel (%p15) target = $region8
    $region5: #{tpu_custom_call.1} parent=1 // loop_body
      %s19 = ssub.s32 %s14, 1
      %s20 = ssub.s32 %s14, 2
      %s21 = sadd.s32 %s14, 1
      %s23 = sadd.s32 %s22, 1
      %p26 = scmp.eq.s32.totalorder %s14, 2
      %p27 = scmp.ne.s32.totalorder %s22, %s24
      %p28 = scmp.eq.s32.totalorder %s14, 0
      %p29 = por %p27, %p28
      %p30 = scmp.ne.s32.totalorder %s22, %s24
      %p31 = scmp.eq.s32.totalorder %s19, 2
      %p32 = por %p30, %p31
      %p33 = scmp.ne.s32.totalorder %s24, %s25
      %p34 = scmp.eq.s32.totalorder %s19, 0
      %p35 = por %p33, %p34
      %p36 = scmp.ne.s32.totalorder %s24, %s25
      %p37 = scmp.eq.s32.totalorder %s20, 2
      %p38 = por %p36, %p37
      %p40 = scmp.ne.s32.totalorder %s25, %s39
      %p41 = scmp.eq.s32.totalorder %s20, 0
      %p42 = por %p40, %p41
      %s44 = sadd.s32 %s43, 1
      %p47 = scmp.eq.s32.totalorder %s14, 2
      %p48 = scmp.ne.s32.totalorder %s43, %s45
      %p49 = scmp.eq.s32.totalorder %s14, 0
      %p50 = por %p48, %p49
      %p51 = scmp.ne.s32.totalorder %s43, %s45
      %p52 = scmp.eq.s32.totalorder %s19, 2
      %p53 = por %p51, %p52
      %p54 = scmp.ne.s32.totalorder %s45, %s46
      %p55 = scmp.eq.s32.totalorder %s19, 0
      %p56 = por %p54, %p55
      %p57 = scmp.ne.s32.totalorder %s45, %s46
      %p58 = scmp.eq.s32.totalorder %s20, 2
      %p59 = por %p57, %p58
      %p61 = scmp.ne.s32.totalorder %s46, %s60
      %p62 = scmp.eq.s32.totalorder %s20, 0
      %p63 = por %p61, %p62
      %s64 = ssub.s32 %s14, %s21
      %p65 = scmp.eq.s32.totalorder %s64, 0
      %s67 = sadd.s32 %s66, 1
      %s68 = scalar_select %p65, %s66, %s67
      %p71 = pneg %p65
      %p72 = scmp.eq.s32.totalorder %s14, 2
      %p73 = por %p71, %p72
      %p74 = scmp.ne.s32.totalorder %s66, %s69
      %p75 = scmp.eq.s32.totalorder %s14, 0
      %p76 = por %p74, %p75
      %p77 = scmp.ne.s32.totalorder %s66, %s69
      %p78 = scmp.eq.s32.totalorder %s19, 2
      %p79 = por %p77, %p78
      %p80 = scmp.ne.s32.totalorder %s69, %s70
      %p81 = scmp.eq.s32.totalorder %s19, 0
      %p82 = por %p80, %p81
      %p83 = scmp.ne.s32.totalorder %s69, %s70
      %p84 = scmp.eq.s32.totalorder %s20, 2
      %p85 = por %p83, %p84
      %p87 = scmp.ne.s32.totalorder %s70, %s86
      %p88 = scmp.eq.s32.totalorder %s20, 0
      %p89 = por %p87, %p88
      %s90 = ssub.s32 %s14, %s21
      %p91 = scmp.eq.s32.totalorder %s90, 0
      %s93 = sadd.s32 %s92, 1
      %s94 = scalar_select %p91, %s92, %s93
      %p97 = pneg %p91
      %p98 = scmp.eq.s32.totalorder %s14, 2
      %p99 = por %p97, %p98
      %p100 = scmp.ne.s32.totalorder %s92, %s95
      %p101 = scmp.eq.s32.totalorder %s14, 0
      %p102 = por %p100, %p101
      %p103 = scmp.ne.s32.totalorder %s92, %s95
      %p104 = scmp.eq.s32.totalorder %s19, 2
      %p105 = por %p103, %p104
      %p106 = scmp.ne.s32.totalorder %s95, %s96
      %p107 = scmp.eq.s32.totalorder %s19, 0
      %p108 = por %p106, %p107
      %p109 = scmp.ne.s32.totalorder %s95, %s96
      %p110 = scmp.eq.s32.totalorder %s20, 2
      %p111 = por %p109, %p110
      %p113 = scmp.ne.s32.totalorder %s96, %s112
      %p114 = scmp.eq.s32.totalorder %s20, 0
      %p115 = por %p113, %p114
      %s116 = ssub.s32 %s14, %s21
      %p117 = scmp.eq.s32.totalorder %s116, 0
      %s119 = sadd.s32 %s118, 1
      %s120 = scalar_select %p117, %s118, %s119
      %p123 = pneg %p117
      %p124 = scmp.eq.s32.totalorder %s14, 2
      %p125 = por %p123, %p124
      %p126 = scmp.ne.s32.totalorder %s118, %s121
      %p127 = scmp.eq.s32.totalorder %s14, 0
      %p128 = por %p126, %p127
      %p129 = scmp.ne.s32.totalorder %s118, %s121
      %p130 = scmp.eq.s32.totalorder %s19, 2
      %p131 = por %p129, %p130
      %p132 = scmp.ne.s32.totalorder %s121, %s122
      %p133 = scmp.eq.s32.totalorder %s19, 0
      %p134 = por %p132, %p133
      %p135 = scmp.ne.s32.totalorder %s121, %s122
      %p136 = scmp.eq.s32.totalorder %s20, 2
      %p137 = por %p135, %p136
      %p139 = scmp.ne.s32.totalorder %s122, %s138
      %p140 = scmp.eq.s32.totalorder %s20, 0
      %p141 = por %p139, %p140
      %s143 = sadd.s32 %s142, 1
      %p146 = scmp.eq.s32.totalorder %s14, 2
      %p147 = scmp.ne.s32.totalorder %s142, %s144
      %p148 = scmp.eq.s32.totalorder %s14, 0
      %p149 = por %p147, %p148
      %p150 = scmp.ne.s32.totalorder %s142, %s144
      %p151 = scmp.eq.s32.totalorder %s19, 2
      %p152 = por %p150, %p151
      %p153 = scmp.ne.s32.totalorder %s144, %s145
      %p154 = scmp.eq.s32.totalorder %s19, 0
      %p155 = por %p153, %p154
      %p156 = scmp.ne.s32.totalorder %s144, %s145
      %p157 = scmp.eq.s32.totalorder %s20, 2
      %p158 = por %p156, %p157
      %p160 = scmp.ne.s32.totalorder %s145, %s159
      %p161 = scmp.eq.s32.totalorder %s20, 0
      %p162 = por %p160, %p161
      %p163 = scmp.le.s32.totalorder 1, %s14
      %p164 = scmp.lt.s32.totalorder %s14, 4
      %p165 = pnand %p163, %p164
      %p166 = pneg %p165
      // Predicated region
      $region9: #{tpu_custom_call.1} parent=5 // pred_check
        _
      $region10: #{tpu_custom_call.1} parent=5 // pred_check_branch
        %168 = sbr.rel (%p165) target = $region12
      $region11: #{tpu_custom_call.1} parent=5 // pred_region
        %s169 = ssub.s32 %s14, 1
        // Predicated region
        $region13: #{tpu_custom_call.1} parent=11 // pred_check
          %p170 = pneg %p35
        $region14: #{tpu_custom_call.1} parent=11 // pred_check_branch
          %172 = sbr.rel (%p170) target = $region16
        $region15: #{tpu_custom_call.1} parent=11 // pred_region
          %174 = vsyncadd [#allocation4], 0
          %s175 = sshll.u32 %s0, 4
          %s176 = int_to_ptr.hbm [resolvable:$true] %s175
          %s177 = sshll.u32 [#allocation3], 4
          %s178 = int_to_ptr.vmem [resolvable:$true] %s177
          %183 = dma.hbm_to_vmem [thread:$0]  %s176, 128, %s178, [#allocation4], 64, 64, 4
        $region16: #{tpu_custom_call.1} parent=11 // pred_fallthru
          _
        // Predicated region
        $region17: #{tpu_custom_call.1} parent=11 // pred_check
          %p184 = pneg %p56
        $region18: #{tpu_custom_call.1} parent=11 // pred_check_branch
          %186 = sbr.rel (%p184) target = $region20
        $region19: #{tpu_custom_call.1} parent=11 // pred_region
          %188 = vsyncadd [#allocation7], 0
          %s189 = sshll.u32 %s1, 4
          %s190 = int_to_ptr.hbm [resolvable:$true] %s189
          %s191 = sshll.u32 [#allocation6], 4
          %s192 = int_to_ptr.vmem [resolvable:$true] %s191
          %197 = dma.hbm_to_vmem [thread:$0]  %s190, 256, %s192, [#allocation7], 128, 128, 8
        $region20: #{tpu_custom_call.1} parent=11 // pred_fallthru
          _
      $region12: #{tpu_custom_call.1} parent=5 // pred_fallthru
        _
      %p198 = scmp.lt.s32.totalorder %s14, 3
      // Predicated region
      $region21: #{tpu_custom_call.1} parent=5 // pred_check
        %p199 = pneg %p198
      $region22: #{tpu_custom_call.1} parent=5 // pred_check_branch
        %201 = sbr.rel (%p199) target = $region24
      $region23: #{tpu_custom_call.1} parent=5 // pred_region
        // Predicated region
        $region25: #{tpu_custom_call.1} parent=23 // pred_check
          %p202 = pneg %p76
        $region26: #{tpu_custom_call.1} parent=23 // pred_check_branch
          %204 = sbr.rel (%p202) target = $region28
        $region27: #{tpu_custom_call.1} parent=23 // pred_region
          %s205 = sand.u32 %s14, 1
          %s206 = scalar_lea.sflag [#allocation4], %s205
          %s207 = sand.u32 %s66, 1
          %s208 = smul.addr %s207, 64
          %s209 = scalar_lea.vmem [#allocation8], %s208
          %211 = vsyncadd %s206, 0
          %s212 = smul.addr %s14, 16
          %s213 = smul.addr %s212, 4
          %s214 = scalar_lea.hbm %s2, %s213
          %s215 = sshll.u32 %s214, 4
          %s216 = int_to_ptr.hbm [resolvable:$true] %s215
          %s217 = sshll.u32 %s209, 4
          %s218 = int_to_ptr.vmem [resolvable:$true] %s217
          %223 = dma.hbm_to_vmem [thread:$0]  %s216, 1024, %s218, %s206, 64, 64, 4
        $region28: #{tpu_custom_call.1} parent=23 // pred_fallthru
          _
        // Predicated region
        $region29: #{tpu_custom_call.1} parent=23 // pred_check
          %p224 = pneg %p102
        $region30: #{tpu_custom_call.1} parent=23 // pred_check_branch
          %226 = sbr.rel (%p224) target = $region32
        $region31: #{tpu_custom_call.1} parent=23 // pred_region
          %s227 = sand.u32 %s14, 1
          %s228 = scalar_lea.sflag [#allocation4], %s227
          %s229 = sand.u32 %s92, 1
          %s230 = smul.addr %s229, 64
          %s231 = scalar_lea.vmem [#allocation9], %s230
          %233 = vsyncadd %s228, 0
          %s234 = smul.addr %s14, 16
          %s235 = smul.addr %s234, 4
          %s236 = scalar_lea.hbm %s3, %s235
          %s237 = sshll.u32 %s236, 4
          %s238 = int_to_ptr.hbm [resolvable:$true] %s237
          %s239 = sshll.u32 %s231, 4
          %s240 = int_to_ptr.vmem [resolvable:$true] %s239
          %245 = dma.hbm_to_vmem [thread:$0]  %s238, 1024, %s240, %s228, 64, 64, 4
        $region32: #{tpu_custom_call.1} parent=23 // pred_fallthru
          _
        // Predicated region
        $region33: #{tpu_custom_call.1} parent=23 // pred_check
          %p246 = pneg %p128
        $region34: #{tpu_custom_call.1} parent=23 // pred_check_branch
          %248 = sbr.rel (%p246) target = $region36
        $region35: #{tpu_custom_call.1} parent=23 // pred_region
          %p249 = scmp.lt.s32.totalorder %s14, 2
          %s250 = scalar_select %p249, %s14, 2
          %s251 = scalar_lea.vmem %s4, %s250
        $region36: #{tpu_custom_call.1} parent=23 // pred_fallthru
          _
      $region24: #{tpu_custom_call.1} parent=5 // pred_fallthru
        _
      %p252 = scmp.le.s32.totalorder 1, %s14
      %p253 = scmp.lt.s32.totalorder %s14, 4
      %p254 = pnand %p252, %p253
      %p255 = pneg %p254
      // Predicated region
      $region37: #{tpu_custom_call.1} parent=5 // pred_check
        _
      $region38: #{tpu_custom_call.1} parent=5 // pred_check_branch
        %257 = sbr.rel (%p254) target = $region40
      $region39: #{tpu_custom_call.1} parent=5 // pred_region
        %s258 = ssub.s32 %s14, 1
        // Predicated region
        $region41: #{tpu_custom_call.1} parent=39 // pred_check
          %p259 = pneg %p35
        $region42: #{tpu_custom_call.1} parent=39 // pred_check_branch
          %261 = sbr.rel (%p259) target = $region44
        $region43: #{tpu_custom_call.1} parent=39 // pred_region
          %263 = dma.done [#allocation4], 128
        $region44: #{tpu_custom_call.1} parent=39 // pred_fallthru
          _
        // Predicated region
        $region45: #{tpu_custom_call.1} parent=39 // pred_check
          %p264 = pneg %p56
        $region46: #{tpu_custom_call.1} parent=39 // pred_check_branch
          %266 = sbr.rel (%p264) target = $region48
        $region47: #{tpu_custom_call.1} parent=39 // pred_region
          %268 = dma.done [#allocation7], 256
        $region48: #{tpu_custom_call.1} parent=39 // pred_fallthru
          _
        %s269 = sand.u32 %s19, 1
        %s270 = scalar_lea.sflag [#allocation4], %s269
        %s271 = sand.u32 %s69, 1
        %s272 = smul.addr %s271, 64
        %s273 = scalar_lea.vmem [#allocation8], %s272
        // Predicated region
        $region49: #{tpu_custom_call.1} parent=39 // pred_check
          %p274 = pneg %p82
        $region50: #{tpu_custom_call.1} parent=39 // pred_check_branch
          %276 = sbr.rel (%p274) target = $region52
        $region51: #{tpu_custom_call.1} parent=39 // pred_region
          %278 = dma.done %s270, 1024
        $region52: #{tpu_custom_call.1} parent=39 // pred_fallthru
          _
        %s279 = sand.u32 %s19, 1
        %s280 = scalar_lea.sflag [#allocation4], %s279
        %s281 = sand.u32 %s95, 1
        %s282 = smul.addr %s281, 64
        %s283 = scalar_lea.vmem [#allocation9], %s282
        // Predicated region
        $region53: #{tpu_custom_call.1} parent=39 // pred_check
          %p284 = pneg %p108
        $region54: #{tpu_custom_call.1} parent=39 // pred_check_branch
          %286 = sbr.rel (%p284) target = $region56
        $region55: #{tpu_custom_call.1} parent=39 // pred_region
          %288 = dma.done %s280, 1024
        $region56: #{tpu_custom_call.1} parent=39 // pred_fallthru
          _
        %p289 = pneg %p35
        %p290 = pneg %p32
        %p291 = pneg %p56
        %p292 = pneg %p53
        %s293 = sand.u32 %s19, 1
        %s294 = scalar_lea.sflag [#allocation4], %s293
        %s295 = sand.u32 %s69, 1
        %s296 = smul.addr %s295, 64
        %s297 = scalar_lea.vmem [#allocation8], %s296
        %p298 = pneg %p82
        %p299 = pneg %p79
        %s300 = sand.u32 %s19, 1
        %s301 = scalar_lea.sflag [#allocation4], %s300
        %s302 = sand.u32 %s95, 1
        %s303 = smul.addr %s302, 64
        %s304 = scalar_lea.vmem [#allocation9], %s303
        %p305 = pneg %p108
        %p306 = pneg %p105
        %p307 = scmp.lt.s32.totalorder %s19, 2
        %s308 = scalar_select %p307, %s19, 2
        %s309 = scalar_lea.vmem %s4, %s308
        %p310 = pneg %p134
        %p311 = pneg %p131
        %p312 = pneg %p155
        %p313 = pneg %p152
        %p314 = scmp.lt.s32.totalorder %s19, 2
        %s315 = scalar_select %p314, %s19, 2
        %s316 = scalar_lea.vmem %s4, %s315
        %p318 = scmp.eq.s32.totalorder %s19, 0
        // Predicated region
        $region57: #{tpu_custom_call.1} parent=39 // pred_check
          %p319 = pneg %p318
        $region58: #{tpu_custom_call.1} parent=39 // pred_check_branch
          %321 = sbr.rel (%p319) target = $region60
        $region59: #{tpu_custom_call.1} parent=39 // pred_region
          %v322 = vld [vmem:[#allocation6] sm:$0xff]
          %v323 = vld [vmem:[#allocation6 + $0x8] sm:$0xff]
          %324 = vst [vmem:[#allocation2] sm:$0xff] %v322
          %325 = vst [vmem:[#allocation2 + $0x8] sm:$0xff] %v323
        $region60: #{tpu_custom_call.1} parent=39 // pred_fallthru
          _
        %v326 = vld [vmem:[#allocation2] sm:$0xff]
        %v327 = vld [vmem:[#allocation2 + $0x8] sm:$0xff]
        %v328 = vpack.c.bf16 %v327, %v326
        %v329 = vld [vmem:[#allocation3] sm:$0xf]
        %v330 = vld [vmem:[#allocation3 + $0x4] sm:$0xf]
        %v333 = vunpack.c.l.b16 %v329
        %v334 = vunpack.c.l.b16 %v330
        %v335 = vpack.c.b16 %v334, %v333
        %vm336 = vcmask 130048
        %v338 = vsel %vm336, %v335, 0
        %340 = vmatpush.bf16.msra.mxu0 0
        %341 = vmatpush.bf16.msra.mxu0 0
        %342 = vmatpush.bf16.msra.mxu0 0
        %343 = vmatpush.bf16.msra.mxu0 0
        %344 = vmatpush.bf16.msra.mxu0 0
        %345 = vmatpush.bf16.msra.mxu0 0
        %346 = vmatpush.bf16.msra.mxu0 0
        %347 = vmatpush.bf16.msra.mxu0 %v328
        %348 = vmatmul.bf16.gmra.mxu0 %v338
        %v349 = vpop.f32.mrf.mxu0
        %v350 = vadd.f32 0.0, %v349
        %v351 = vpop.f32.mrf.mxu0
        %v352 = vadd.f32 0.0, %v351
        %353 = vdwg.mxu0
        %v354 = vpack.c.bf16 %v352, %v350
        %v355 = vld [vmem:[%s273] sm:$0xf]
        %v356 = vld [vmem:[%s273 + $0x4] sm:$0xf]
        %v357 = vld [vmem:[%s273 + $0x8] sm:$0xf]
        %v358 = vld [vmem:[%s273 + $0xc] sm:$0xf]
        %v359 = vld [vmem:[%s273 + $0x10] sm:$0xf]
        %v360 = vld [vmem:[%s273 + $0x14] sm:$0xf]
        %v361 = vld [vmem:[%s273 + $0x18] sm:$0xf]
        %v362 = vld [vmem:[%s273 + $0x1c] sm:$0xf]
        %v363 = vld [vmem:[%s273 + $0x20] sm:$0xf]
        %v364 = vld [vmem:[%s273 + $0x24] sm:$0xf]
        %v365 = vld [vmem:[%s273 + $0x28] sm:$0xf]
        %v366 = vld [vmem:[%s273 + $0x2c] sm:$0xf]
        %v367 = vld [vmem:[%s273 + $0x30] sm:$0xf]
        %v368 = vld [vmem:[%s273 + $0x34] sm:$0xf]
        %v369 = vld [vmem:[%s273 + $0x38] sm:$0xf]
        %v370 = vld [vmem:[%s273 + $0x3c] sm:$0xf]
        %v371 = vld [vmem:[%s283] sm:$0xf]
        %v372 = vld [vmem:[%s283 + $0x4] sm:$0xf]
        %v373 = vld [vmem:[%s283 + $0x8] sm:$0xf]
        %v374 = vld [vmem:[%s283 + $0xc] sm:$0xf]
        %v375 = vld [vmem:[%s283 + $0x10] sm:$0xf]
        %v376 = vld [vmem:[%s283 + $0x14] sm:$0xf]
        %v377 = vld [vmem:[%s283 + $0x18] sm:$0xf]
        %v378 = vld [vmem:[%s283 + $0x1c] sm:$0xf]
        %v379 = vld [vmem:[%s283 + $0x20] sm:$0xf]
        %v380 = vld [vmem:[%s283 + $0x24] sm:$0xf]
        %v381 = vld [vmem:[%s283 + $0x28] sm:$0xf]
        %v382 = vld [vmem:[%s283 + $0x2c] sm:$0xf]
        %v383 = vld [vmem:[%s283 + $0x30] sm:$0xf]
        %v384 = vld [vmem:[%s283 + $0x34] sm:$0xf]
        %v385 = vld [vmem:[%s283 + $0x38] sm:$0xf]
        %v386 = vld [vmem:[%s283 + $0x3c] sm:$0xf]
        %v403 = vunpack.c.l.b16 %v371
        %v404 = vunpack.c.l.b16 %v372
        %v405 = vunpack.c.l.b16 %v373
        %v406 = vunpack.c.l.b16 %v374
        %v407 = vunpack.c.l.b16 %v375
        %v408 = vunpack.c.l.b16 %v376
        %v409 = vunpack.c.l.b16 %v377
        %v410 = vunpack.c.l.b16 %v378
        %v411 = vunpack.c.l.b16 %v379
        %v412 = vunpack.c.l.b16 %v380
        %v413 = vunpack.c.l.b16 %v381
        %v414 = vunpack.c.l.b16 %v382
        %v415 = vunpack.c.l.b16 %v383
        %v416 = vunpack.c.l.b16 %v384
        %v417 = vunpack.c.l.b16 %v385
        %v418 = vunpack.c.l.b16 %v386
        %v419 = vpack.c.b16 %v404, %v403
        %v420 = vpack.c.b16 %v406, %v405
        %v421 = vpack.c.b16 %v408, %v407
        %v422 = vpack.c.b16 %v410, %v409
        %v423 = vpack.c.b16 %v412, %v411
        %v424 = vpack.c.b16 %v414, %v413
        %v425 = vpack.c.b16 %v416, %v415
        %v426 = vpack.c.b16 %v418, %v417
        %435 = vmatpush.bf16.msra.mxu0 %v426
        %436 = vmatpush.bf16.msra.mxu0 %v425
        %437 = vmatpush.bf16.msra.mxu0 %v424
        %438 = vmatpush.bf16.msra.mxu0 %v423
        %439 = vmatpush.bf16.msra.mxu0 %v422
        %440 = vmatpush.bf16.msra.mxu0 %v421
        %441 = vmatpush.bf16.msra.mxu0 %v420
        %442 = vmatpush.bf16.msra.mxu0 %v419
        %443 = vmatmul.bf16.gmra.mxu0 %v328
        %v444 = vpop.f32.mrf.mxu0
        %v445 = vadd.f32 0.0, %v444
        %v446 = vpop.f32.mrf.mxu0
        %v447 = vadd.f32 0.0, %v446
        %448 = vdwg.mxu0
        %v465 = vunpack.c.l.b16 %v355
        %v466 = vunpack.c.l.b16 %v356
        %v467 = vunpack.c.l.b16 %v357
        %v468 = vunpack.c.l.b16 %v358
        %v469 = vunpack.c.l.b16 %v359
        %v470 = vunpack.c.l.b16 %v360
        %v471 = vunpack.c.l.b16 %v361
        %v472 = vunpack.c.l.b16 %v362
        %v473 = vunpack.c.l.b16 %v363
        %v474 = vunpack.c.l.b16 %v364
        %v475 = vunpack.c.l.b16 %v365
        %v476 = vunpack.c.l.b16 %v366
        %v477 = vunpack.c.l.b16 %v367
        %v478 = vunpack.c.l.b16 %v368
        %v479 = vunpack.c.l.b16 %v369
        %v480 = vunpack.c.l.b16 %v370
        %v481 = vpack.c.b16 %v466, %v465
        %v482 = vpack.c.b16 %v468, %v467
        %v483 = vpack.c.b16 %v470, %v469
        %v484 = vpack.c.b16 %v472, %v471
        %v485 = vpack.c.b16 %v474, %v473
        %v486 = vpack.c.b16 %v476, %v475
        %v487 = vpack.c.b16 %v478, %v477
        %v488 = vpack.c.b16 %v480, %v479
        %497 = vmatpush.bf16.msra.mxu0 %v488
        %498 = vmatpush.bf16.msra.mxu0 %v487
        %499 = vmatpush.bf16.msra.mxu0 %v486
        %500 = vmatpush.bf16.msra.mxu0 %v485
        %501 = vmatpush.bf16.msra.mxu0 %v484
        %502 = vmatpush.bf16.msra.mxu0 %v483
        %503 = vmatpush.bf16.msra.mxu0 %v482
        %504 = vmatpush.bf16.msra.mxu0 %v481
        %505 = vmatmul.bf16.gmra.mxu0 %v354
        %v506 = vpop.f32.mrf.mxu0
        %v507 = vadd.f32 %v445, %v506
        %v508 = vpop.f32.mrf.mxu0
        %v509 = vadd.f32 %v447, %v508
        %510 = vdwg.mxu0
        %v511 = vld [vmem:[%s316] sm:$0x1]
        %v513 = vperm.slane %v511, 0
        %v515 = vadd.f32 %v507, %v513
        %v516 = vadd.f32 %v509, %v513
        %p517 = scmp.lt.s32.totalorder %s19, 2
        // Predicated region
        $region61: #{tpu_custom_call.1} parent=39 // pred_check
          %p518 = pneg %p517
        $region62: #{tpu_custom_call.1} parent=39 // pred_check_branch
          %520 = sbr.rel (%p518) target = $region64
        $region63: #{tpu_custom_call.1} parent=39 // pred_region
          %v521 = vmax.f32 %v515, 0.0
          %v522 = vmax.f32 %v516, 0.0
          %523 = vst [vmem:[#allocation2] sm:$0xff] %v521
          %524 = vst [vmem:[#allocation2 + $0x8] sm:$0xff] %v522
        $region64: #{tpu_custom_call.1} parent=39 // pred_fallthru
          _
        %p525 = scmp.eq.s32.totalorder %s19, 2
        // Predicated region
        $region65: #{tpu_custom_call.1} parent=39 // pred_check
          %p526 = pneg %p525
        $region66: #{tpu_custom_call.1} parent=39 // pred_check_branch
          %528 = sbr.rel (%p526) target = $region68
        $region67: #{tpu_custom_call.1} parent=39 // pred_region
          %529 = vst [vmem:[#allocation10] sm:$0xff] %v515
          %530 = vst [vmem:[#allocation10 + $0x8] sm:$0xff] %v516
        $region68: #{tpu_custom_call.1} parent=39 // pred_fallthru
          _
        // Predicated region
        $region69: #{tpu_custom_call.1} parent=39 // pred_check
          %p531 = pneg %p152
        $region70: #{tpu_custom_call.1} parent=39 // pred_check_branch
          %533 = sbr.rel (%p531) target = $region72
        $region71: #{tpu_custom_call.1} parent=39 // pred_region
          %535 = vsyncadd [#allocation5], 0
          %s536 = sshll.u32 [#allocation10], 4
          %s537 = int_to_ptr.vmem [resolvable:$true] %s536
          %s538 = sshll.u32 %s5, 4
          %s539 = int_to_ptr.hbm [resolvable:$true] %s538
          %544 = dma.vmem_to_hbm [thread:$0]  %s537, 256, %s539, [#allocation5], 128, 128, 8
        $region72: #{tpu_custom_call.1} parent=39 // pred_fallthru
          _
        // Predicated region
        $region73: #{tpu_custom_call.1} parent=39 // pred_check
          %p545 = pneg %p152
        $region74: #{tpu_custom_call.1} parent=39 // pred_check_branch
          %547 = sbr.rel (%p545) target = $region76
        $region75: #{tpu_custom_call.1} parent=39 // pred_region
          %549 = dma.done [#allocation5], 256
        $region76: #{tpu_custom_call.1} parent=39 // pred_fallthru
          _
      $region40: #{tpu_custom_call.1} parent=5 // pred_fallthru
        _
      %p550 = scmp.le.s32.totalorder 2, %s14
      // Predicated region
      $region77: #{tpu_custom_call.1} parent=5 // pred_check
        %p551 = pneg %p550
      $region78: #{tpu_custom_call.1} parent=5 // pred_check_branch
        %553 = sbr.rel (%p551) target = $region80
      $region79: #{tpu_custom_call.1} parent=5 // pred_region
        %s554 = ssub.s32 %s14, 2
      $region80: #{tpu_custom_call.1} parent=5 // pred_fallthru
        _
    $region6: #{tpu_custom_call.1} parent=1 // loop_footer
      %s18 = sadd.s32 1, %s14
    $region7: #{tpu_custom_call.1} parent=1 // loop_footer_branch
      %13 = sbr.rel target = $region3
    $region8: #{tpu_custom_call.1} parent=1 // loop_exit
      _
    %555 = vsyncpa [#allocation4], 1
    %s556 = scalar_lea.sflag [#allocation4], 1
    %557 = vsyncpa %s556, 1
    %558 = vsyncpa [#allocation7], 1
    %559 = vsyncpa [#allocation5], 1
    %s560 = scalar_lea.sflag [#allocation5], 1
    %561 = vsyncpa %s560, 1

</llo_original>
